<compile_context>
chip_gen: v7x
topology: tpu7x:2x2x1
jax: 0.10.0
libtpu: 0.0.40
codegen_flags: <defaults>
</compile_context>

<pallas_src>
import functools

import jax
import jax.numpy as jnp
from jax import lax
from jax.experimental import pallas as pl
from jax.experimental.pallas import tpu as pltpu

EPS = 1e-5


def _round_up(a, b):
    return (a + b - 1) // b * b


def _hw_budget():
    """(vmem_limit_bytes, conv M-tile, BN M-tile) per TPU generation."""
    vmem_cap = 64 * 1024 * 1024
    try:
        vmem_cap = pltpu.get_tpu_info().vmem_capacity_bytes
    except Exception:
        pass
    if vmem_cap >= 128 * 1024 * 1024:          # v5e / v6e: 128 MiB physical VMEM
        return 96 * 1024 * 1024, 512, 2048
    return 48 * 1024 * 1024, 256, 1024          # v7x: 64 MiB physical VMEM


def _pick_row_tile(m_pad, target):
    """Largest multiple of 16 that divides m_pad and is <= target, preferring >= 2 grid
    blocks (v7x megacore).  Avoids the old gcd collapse to 16-row tiles."""
    cands = [t for t in range(16, m_pad + 1, 16) if m_pad % t == 0 and t <= target]
    if not cands:
        return m_pad
    two_plus = [t for t in cands if m_pad // t >= 2]
    return max(two_plus) if two_plus else max(cands)


# ----------------------------- Pallas kernels -----------------------------

def conv_mm_stats_kernel(p_ref, w_ref, z_ref, sum_ref, ssq_ref):
    """z = patches @ W (bf16 MXU inputs, f32 accumulation), stored as bf16, with a fused
    epilogue producing per-grid-block per-channel sum / sum-of-squares for BatchNorm.
    No bias (cancelled by train-mode BN) and no row masking: padded LHS rows are exact
    zeros, so they contribute exactly 0 to both statistics."""
    z = jnp.dot(p_ref[...], w_ref[...], preferred_element_type=jnp.float32)
    z_ref[...] = z.astype(z_ref.dtype)
    # XLU-slot reductions; essentially free while the MXU dominates.
    sum_ref[...] = jnp.sum(z, axis=0, keepdims=True)[None]
    ssq_ref[...] = jnp.sum(z * z, axis=0, keepdims=True)[None]


def bn_affine_kernel(x_ref, scale_ref, shift_ref, o_ref, *, do_relu):
    y = x_ref[...].astype(jnp.float32) * scale_ref[...] + shift_ref[...]
    if do_relu:
        y = jnp.maximum(y, 0.0)
    o_ref[...] = y.astype(o_ref.dtype)


def bn_residual_relu_kernel(z_ref, sc2_ref, sh2_ref, r_ref, sc3_ref, sh3_ref, o_ref):
    """relu(bn2(conv2) + bn3(conv3) / identity), fully fused: the downsample/identity
    branch is never materialized; it is read straight from the conv1||conv3 slab."""
    y = (z_ref[...].astype(jnp.float32) * sc2_ref[...] + sh2_ref[...]
         + r_ref[...].astype(jnp.float32) * sc3_ref[...] + sh3_ref[...])
    o_ref[...] = jnp.maximum(y, 0.0).astype(o_ref.dtype)


# ----------------------------- wrappers -----------------------------------

def im2col_3x3(x_nhwc, stride):
    """Extract 3x3 patches with padding=1.  Returns ((M, 9*Cin), (N, Ho, Wo))."""
    N, H, W, C = x_nhwc.shape
    xp = jnp.pad(x_nhwc, ((0, 0), (1, 1), (1, 1), (0, 0)))
    Ho = (H + 2 - 3) // stride + 1
    Wo = (W + 2 - 3) // stride + 1
    cols = []
    for dh in range(3):
        for dw in range(3):
            cols.append(
                xp[:, dh:dh + (Ho - 1) * stride + 1:stride,
                      dw:dw + (Wo - 1) * stride + 1:stride, :]
            )
    p = jnp.stack(cols, axis=3)                      # (N, Ho, Wo, 9, C)
    return p.reshape(N * Ho * Wo, 9 * C), (N, Ho, Wo)


def pack_conv_weights(specs, cin, cpad):
    """Pack one or more OIHW 3x3 conv weights into a single lane-dense (9*cin, cpad)
    RHS, each at its own column offset.  Matches im2col order (kh, kw, cin), cin fastest.
    No bias row: the conv bias is cancelled by train-mode BatchNorm mean subtraction."""
    wmat = jnp.zeros((9 * cin, cpad), jnp.float32)
    for w_oihw, off in specs:
        cout = w_oihw.shape[0]
        wm = jnp.transpose(w_oihw, (2, 3, 1, 0)).reshape(9 * cin, cout)
        wmat = wmat.at[:, off:off + cout].set(wm.astype(jnp.float32))
    return wmat


def conv3x3_pallas(x_nhwc, wmat, stride, *, tm, vmem_limit):
    """3x3 conv (pad=1) via im2col + Pallas tiled matmul with fused BN partial stats.

    Returns (z (m_pad, cpad) bf16, ch_sum (1, cpad) f32, ch_sumsq (1, cpad) f32,
             (n, ho, wo, M, m_pad))."""
    x_bf = x_nhwc.astype(jnp.bfloat16)               # bf16 MXU inputs, halve LHS bytes
    patches, (n, ho, wo) = im2col_3x3(x_bf, stride)
    M, K = patches.shape
    cpad = wmat.shape[1]

    tm_eff = min(max(16, tm - tm % 16), _round_up(M, 16))
    m_pad = _round_up(M, tm_eff)
    # keep >= 2 grid blocks when possible (v7x has two TensorCores per chip)
    if m_pad // tm_eff < 2 and tm_eff % 32 == 0:
        tm_eff //= 2
        m_pad = _round_up(M, tm_eff)
    grid_m = m_pad // tm_eff
    patches_p = jnp.pad(patches, ((0, m_pad - M), (0, 0)))

    z, psum, pssq = pl.pallas_call(
        conv_mm_stats_kernel,
        out_shape=(
            jax.ShapeDtypeStruct((m_pad, cpad), jnp.bfloat16),
            jax.ShapeDtypeStruct((grid_m, 1, cpad), jnp.float32),
            jax.ShapeDtypeStruct((grid_m, 1, cpad), jnp.float32),
        ),
        grid=(grid_m,),
        in_specs=[
            pl.BlockSpec((tm_eff, K), lambda i: (i, 0)),
            pl.BlockSpec((K, cpad), lambda i: (0, 0)),
        ],
        out_specs=(
            pl.BlockSpec((tm_eff, cpad), lambda i: (i, 0)),
            pl.BlockSpec((1, 1, cpad), lambda i: (i, 0, 0)),
            pl.BlockSpec((1, 1, cpad), lambda i: (i, 0, 0)),
        ),
        compiler_params=pltpu.CompilerParams(
            dimension_semantics=("parallel",),
            vmem_limit_bytes=vmem_limit),
    )(patches_p, wmat.astype(jnp.bfloat16))

    ch_sum = jnp.sum(psum, axis=0)                   # tiny (grid, 1, cpad) reductions
    ch_ssq = jnp.sum(pssq, axis=0)
    return z, ch_sum, ch_ssq, (n, ho, wo, M, m_pad)


def bn_scale_shift(ch_sum, ch_ssq, m, gamma, beta, off, width):
    """Fold training-mode BatchNorm (batch stats) into per-channel scale/shift rows at
    column offset `off` of a `width`-wide lane-dense slab (zeros elsewhere).  `m` is the
    number of VALID rows; padded rows contribute exactly 0 to the fused statistics."""
    cout = gamma.shape[0]
    mean = ch_sum[0, off:off + cout] / m
    var = jnp.maximum(ch_ssq[0, off:off + cout] / m - mean * mean, 0.0)
    g_inv = gamma.astype(jnp.float32) / jnp.sqrt(var + EPS)
    scale = jnp.zeros((1, width), jnp.float32).at[0, off:off + cout].set(g_inv)
    shift = jnp.zeros((1, width), jnp.float32).at[0, off:off + cout].set(
        beta.astype(jnp.float32) - mean * g_inv)
    return scale, shift


def bn_affine_pallas(z, scale, shift, *, relu, out_dtype, tb, width, vmem_limit):
    """y = z[:, :width]*scale + shift [ReLU]; tiled over M with a parallel grid.
    Reading/writing only `width` columns halves bn1 traffic in the downsample case."""
    m_pad, zc = z.shape
    assert width <= zc and scale.shape == (1, width) and shift.shape == (1, width)
    tb_eff = _pick_row_tile(m_pad, tb)
    kern = functools.partial(bn_affine_kernel, do_relu=relu)
    return pl.pallas_call(
        kern,
        out_shape=jax.ShapeDtypeStruct((m_pad, width), out_dtype),
        grid=(m_pad // tb_eff,),
        in_specs=[
            pl.BlockSpec((tb_eff, width), lambda i: (i, 0)),
            pl.BlockSpec((1, width), lambda i: (0, 0)),
            pl.BlockSpec((1, width), lambda i: (0, 0)),
        ],
        out_specs=pl.BlockSpec((tb_eff, width), lambda i: (i, 0)),
        compiler_params=pltpu.CompilerParams(
            dimension_semantics=("parallel",),
            vmem_limit_bytes=vmem_limit),
    )(z, scale, shift)


def bn_residual_relu_pallas(z, sc2, sh2, res, sc3, sh3, *, out_dtype, tb, vmem_limit):
    """relu(z*sc2 + sh2 + res*sc3 + sh3), tiled over M with a parallel grid."""
    m_pad, cpad = z.shape
    assert res.shape == z.shape
    tb_eff = _pick_row_tile(m_pad, tb)
    return pl.pallas_call(
        bn_residual_relu_kernel,
        out_shape=jax.ShapeDtypeStruct((m_pad, cpad), out_dtype),
        grid=(m_pad // tb_eff,),
        in_specs=[
            pl.BlockSpec((tb_eff, cpad), lambda i: (i, 0)),
            pl.BlockSpec((1, cpad), lambda i: (0, 0)),
            pl.BlockSpec((1, cpad), lambda i: (0, 0)),
            pl.BlockSpec((tb_eff, cpad), lambda i: (i, 0)),
            pl.BlockSpec((1, cpad), lambda i: (0, 0)),
            pl.BlockSpec((1, cpad), lambda i: (0, 0)),
        ],
        out_specs=pl.BlockSpec((tb_eff, cpad), lambda i: (i, 0)),
        compiler_params=pltpu.CompilerParams(
            dimension_semantics=("parallel",),
            vmem_limit_bytes=vmem_limit),
    )(z, sc2, sh2, res, sc3, sh3)


# ----------------------------- ResnetBlock forward -------------------------

def resnet_block_forward(x_nchw, params, stride):
    vmem_limit, tm, tb = _hw_budget()

    x = jnp.transpose(x_nchw, (0, 2, 3, 1)).astype(jnp.float32)   # NCHW -> NHWC
    N, H, W, Cin = x.shape
    Cout = params["w1"].shape[0]
    down = (stride != 1) or (Cin != Cout)

    # One lane-dense channel slab: [conv1 | conv3-or-identity], always 2*Cout wide.
    cpad = _round_up(2 * Cout, 128)
    cpad1 = _round_up(Cout, 128)     # narrow slab for h1 (only what conv2 consumes)
    off = Cout                       # column offset of conv2 / bn3 / identity columns

    # conv1 fused with the identity branch in ONE matmul (identical im2col LHS):
    #   down     -> columns [Cout, 2Cout) hold conv3(x)
    #   non-down -> columns [Cout, 2Cout) hold x itself via an identity 3x3 kernel
    if down:
        w_branch = params["w3"]
    else:
        eye = jnp.eye(Cout, dtype=jnp.float32)
        w_branch = jnp.zeros((Cout, Cin, 3, 3), jnp.float32).at[:, :, 1, 1].set(eye)
    wA = pack_conv_weights([(params["w1"], 0), (w_branch, off)], Cin, cpad)
    zA, sumA, ssqA, (n, ho, wo, M1, m_pad1) = conv3x3_pallas(
        x, wA, stride, tm=tm, vmem_limit=vmem_limit)

    # bn1 + relu on columns [0, Cout), emitted as a narrow bf16 slab
    sc1, sh1 = bn_scale_shift(sumA, ssqA, M1, params["g1"], params["be1"], 0, cpad1)
    h1 = bn_affine_pallas(zA, sc1, sh1, relu=True, out_dtype=jnp.bfloat16,
                          tb=tb, width=cpad1, vmem_limit=vmem_limit)
    h1_img = h1[:M1, :Cout].reshape(n, ho, wo, Cout)

    # conv2, placed at columns [Cout, 2Cout) so the residual add needs no realignment
    wB = pack_conv_weights([(params["w2"], off)], Cout, cpad)
    zB, sumB, ssqB, (n2, ho2, wo2, M2, m_pad2) = conv3x3_pallas(
        h1_img, wB, 1, tm=tm, vmem_limit=vmem_limit)
    assert (m_pad2, zB.shape[1]) == (m_pad1, zA.shape[1]), (zB.shape, zA.shape)

    sc2, sh2 = bn_scale_shift(sumB, ssqB, M2, params["g2"], params["be2"], off, cpad)
    if down:
        sc3, sh3 = bn_scale_shift(sumA, ssqA, M1, params["g3"], params["be3"], off, cpad)
    else:
        sc3 = jnp.zeros((1, cpad), jnp.float32).at[0, off:off + Cout].set(1.0)
        sh3 = jnp.zeros((1, cpad), jnp.float32)

    # relu(bn2(conv2) + bn3(conv3)/identity) — fully fused, reads zA/zB slabs directly
    out = bn_residual_relu_pallas(zB, sc2, sh2, zA, sc3, sh3,
                                  out_dtype=jnp.float32, tb=tb, vmem_limit=vmem_limit)
    out_img = out[:M2, off:off + Cout].reshape(n2, ho2, wo2, Cout)
    return jnp.transpose(out_img, (0, 3, 1, 2))                   # NHWC -> NCHW


# ----------------------------- pure-JAX reference --------------------------

def ref_forward(x, params, stride):
    def conv(x, w, b, s):
        y = lax.conv_general_dilated(
            x, w, (s, s), ((1, 1), (1, 1)),
            dimension_numbers=("NCHW", "OIHW", "NCHW"))
        return y + b[None, :, None, None]

    def bn(y, g, be):
        m = y.mean(axis=(0, 2, 3), keepdims=True)
        v = y.var(axis=(0, 2, 3), keepdims=True)     # biased, like PyTorch train-mode
        return (y - m) / jnp.sqrt(v + EPS) * g[None, :, None, None] + be[None, :, None, None]

    Cout, Cin = params["w1"].shape[0], params["w1"].shape[1]
    down = (stride != 1) or (Cin != Cout)
    identity = x
    h = jax.nn.relu(bn(conv(x, params["w1"], params["b1"], stride), params["g1"], params["be1"]))
    h = bn(conv(h, params["w2"], params["b2"], 1), params["g2"], params["be2"])
    if down:
        identity = bn(conv(x, params["w3"], params["b3"], stride), params["g3"], params["be3"])
    return jax.nn.relu(h + identity)


# ----------------------------- main ----------------------------------------

def _make_params(key, input_nc, output_nc):
    ks = jax.random.split(key, 12)
    return {
        "w1": 0.1 * jax.random.normal(ks[0], (output_nc, input_nc, 3, 3), jnp.float32),
        "b1": 0.1 * jax.random.normal(ks[1], (output_nc,), jnp.float32),
        "g1": 1.0 + 0.1 * jax.random.normal(ks[2], (output_nc,), jnp.float32),
        "be1": 0.1 * jax.random.normal(ks[3], (output_nc,), jnp.float32),
        "w2": 0.1 * jax.random.normal(ks[4], (output_nc, output_nc, 3, 3), jnp.float32),
        "b2": 0.1 * jax.random.normal(ks[5], (output_nc,), jnp.float32),
        "g2": 1.0 + 0.1 * jax.random.normal(ks[6], (output_nc,), jnp.float32),
        "be2": 0.1 * jax.random.normal(ks[7], (output_nc,), jnp.float32),
        "w3": 0.1 * jax.random.normal(ks[8], (output_nc, input_nc, 3, 3), jnp.float32),
        "b3": 0.1 * jax.random.normal(ks[9], (output_nc,), jnp.float32),
        "g3": 1.0 + 0.1 * jax.random.normal(ks[10], (output_nc,), jnp.float32),
        "be3": 0.1 * jax.random.normal(ks[11], (output_nc,), jnp.float32),
    }


if __name__ == "__main__":
    key = jax.random.PRNGKey(0)
    k_par1, k_par2, k_x1, k_x2 = jax.random.split(key, 4)

    # bf16 MXU inputs and bf16 intermediate slabs (f32 stats/accumulation) vs f32 ref:
    # loose max-error tolerance, plus a tighter mean-abs-error check for rigor.
    ATOL = RTOL = 1e-1
    MEAN_TOL = 1e-2

    # Case 1: downsample path (stride 2, 4 -> 8 channels; conv1||conv3 fused matmul).
    N, H, W = 2, 16, 16
    input_nc, output_nc, stride = 4, 8, 2
    params = _make_params(k_par1, input_nc, output_nc)
    x = jax.random.normal(k_x1, (N, input_nc, H, W), jnp.float32)
    out = jax.block_until_ready(resnet_block_forward(x, params, stride))
    ref = jax.block_until_ready(ref_forward(x, params, stride))
    assert out.shape == (N, output_nc, H // stride, W // stride), out.shape
    err = jnp.abs(out - ref)
    assert jnp.allclose(out, ref, atol=ATOL, rtol=RTOL), float(jnp.max(err))
    assert float(jnp.mean(err)) < MEAN_TOL, float(jnp.mean(err))

    # Case 2: plain residual path (stride 1, same channels; identity packed into conv1 slab).
    input_nc2, output_nc2, stride2 = 8, 8, 1
    params2 = _make_params(k_par2, input_nc2, output_nc2)
    x2 = jax.random.normal(k_x2, (N, input_nc2, H, W), jnp.float32)
    out2 = jax.block_until_ready(resnet_block_forward(x2, params2, stride2))
    ref2 = jax.block_until_ready(ref_forward(x2, params2, stride2))
    assert out2.shape == (N, output_nc2, H, W), out2.shape
    err2 = jnp.abs(out2 - ref2)
    assert jnp.allclose(out2, ref2, atol=ATOL, rtol=RTOL), float(jnp.max(err2))
    assert float(jnp.mean(err2)) < MEAN_TOL, float(jnp.mean(err2))

    print("KERNEL_OK")
</pallas_src>

<mosaic_0001>
module attributes {stable_mosaic.version = 11 : i64} {
  func.func @conv_mm_stats_kernel(%arg0: i32, %arg1: memref<64x36xbf16, #tpu.memory_space<vmem>>, %arg2: memref<36x128xbf16, #tpu.memory_space<vmem>>, %arg3: memref<64x128xbf16, #tpu.memory_space<vmem>>, %arg4: memref<1x1x128xf32, #tpu.memory_space<vmem>>, %arg5: memref<1x1x128xf32, #tpu.memory_space<vmem>>) attributes {dimension_semantics = [#tpu.dimension_semantics<parallel>], iteration_bounds = array<i64: 2>, scalar_prefetch = 0 : i64, scratch_operands = 0 : i64, tpu.core_type = #tpu.core_type<tc>, window_params = [{transform_indices = @transform_0, window_bounds = array<i64: 64, 36>}, {pipeline_mode = #tpu.pipeline_mode<synchronous>, transform_indices = @transform_1, window_bounds = array<i64: 36, 128>}, {transform_indices = @transform_2, window_bounds = array<i64: 64, 128>}, {transform_indices = @transform_3, window_bounds = array<i64: 1, 1, 128>}, {transform_indices = @transform_4, window_bounds = array<i64: 1, 1, 128>}]} {
    %c0 = arith.constant 0 : index
    %c0_0 = arith.constant 0 : index
    %0 = vector.load %arg1[%c0, %c0_0] : memref<64x36xbf16, #tpu.memory_space<vmem>>, vector<64x36xbf16>
    %c0_1 = arith.constant 0 : index
    %c0_2 = arith.constant 0 : index
    %1 = vector.load %arg2[%c0_1, %c0_2] : memref<36x128xbf16, #tpu.memory_space<vmem>>, vector<36x128xbf16>
    %cst = arith.constant dense<0.000000e+00> : vector<64x128xf32>
    %2 = tpu.matmul %0, %1, %cst {dimension_numbers = #tpu.dot_dimension_numbers<[1], [0], [0], [1], [0, 0, 1, 1], [], []>} : vector<64x36xbf16>, vector<36x128xbf16>, vector<64x128xf32> -> vector<64x128xf32>
    %3 = arith.truncf %2 : vector<64x128xf32> to vector<64x128xbf16>
    %c0_3 = arith.constant 0 : index
    %c0_4 = arith.constant 0 : index
    %4 = vector.load %arg3[%c0_3, %c0_4] : memref<64x128xbf16, #tpu.memory_space<vmem>>, vector<64x128xbf16>
    tpu.vector_store %arg3[%c0_3, %c0_4], %3 {strides = array<i32>} : memref<64x128xbf16, #tpu.memory_space<vmem>>, vector<64x128xbf16>,
    %cst_5 = arith.constant dense<0.000000e+00> : vector<128xf32>
    %5 = vector.multi_reduction <add>, %2, %cst_5 [0] : vector<64x128xf32> to vector<128xf32>
    %6 = vector.shape_cast %5 : vector<128xf32> to vector<1x128xf32>
    %7 = vector.shape_cast %6 : vector<1x128xf32> to vector<1x1x128xf32>
    %c0_6 = arith.constant 0 : index
    %c0_7 = arith.constant 0 : index
    %c0_8 = arith.constant 0 : index
    %8 = vector.load %arg4[%c0_6, %c0_7, %c0_8] : memref<1x1x128xf32, #tpu.memory_space<vmem>>, vector<1x1x128xf32>
    tpu.vector_store %arg4[%c0_6, %c0_7, %c0_8], %7 {strides = array<i32>} : memref<1x1x128xf32, #tpu.memory_space<vmem>>, vector<1x1x128xf32>,
    %9 = arith.mulf %2, %2 : vector<64x128xf32>
    %cst_9 = arith.constant dense<0.000000e+00> : vector<128xf32>
    %10 = vector.multi_reduction <add>, %9, %cst_9 [0] : vector<64x128xf32> to vector<128xf32>
    %11 = vector.shape_cast %10 : vector<128xf32> to vector<1x128xf32>
    %12 = vector.shape_cast %11 : vector<1x128xf32> to vector<1x1x128xf32>
    %c0_10 = arith.constant 0 : index
    %c0_11 = arith.constant 0 : index
    %c0_12 = arith.constant 0 : index
    %13 = vector.load %arg5[%c0_10, %c0_11, %c0_12] : memref<1x1x128xf32, #tpu.memory_space<vmem>>, vector<1x1x128xf32>
    tpu.vector_store %arg5[%c0_10, %c0_11, %c0_12], %12 {strides = array<i32>} : memref<1x1x128xf32, #tpu.memory_space<vmem>>, vector<1x1x128xf32>,
    return
  }
  func.func @transform_0(%arg0: i32) -> (i32, i32) {
    %c0_i32 = arith.constant 0 : i32
    %c0_i32_0 = arith.constant 0 : i32
    return %arg0, %c0_i32 : i32, i32
  }
  func.func @transform_1(%arg0: i32) -> (i32, i32) {
    %c0_i32 = arith.constant 0 : i32
    %c0_i32_0 = arith.constant 0 : i32
    %c0_i32_1 = arith.constant 0 : i32
    return %c0_i32, %c0_i32_0 : i32, i32
  }
  func.func @transform_2(%arg0: i32) -> (i32, i32) {
    %c0_i32 = arith.constant 0 : i32
    %c0_i32_0 = arith.constant 0 : i32
    return %arg0, %c0_i32 : i32, i32
  }
  func.func @transform_3(%arg0: i32) -> (i32, i32, i32) {
    %c0_i32 = arith.constant 0 : i32
    %c0_i32_0 = arith.constant 0 : i32
    %c0_i32_1 = arith.constant 0 : i32
    return %arg0, %c0_i32, %c0_i32_0 : i32, i32, i32
  }
  func.func @transform_4(%arg0: i32) -> (i32, i32, i32) {
    %c0_i32 = arith.constant 0 : i32
    %c0_i32_0 = arith.constant 0 : i32
    %c0_i32_1 = arith.constant 0 : i32
    return %arg0, %c0_i32, %c0_i32_0 : i32, i32, i32
  }
}

</mosaic_0001>

<llo_original>
// kernel: tpu_custom_call.1
$region0: #{tpu_custom_call.1}
  #allocation0 [shape = 'u32[]', space=smem, size = 0x4, offset = 0x4, fixed_abs, tag = 'smem constant byte address 0x4 - core index']
  #allocation1 [shape = 'u32[144,128]{1,0:T(1,128)}', space=vmem, size = 0x12000, scoped, tag = 'internal scratch']
  %s0 = inlined_call_operand.vmem [shape: bf16[128,36], index: 0, kind: input, shape index: {}]
  %s1 = inlined_call_operand.vmem [shape: bf16[36,128], index: 1, kind: input, shape index: {}]
  %s2 = inlined_call_operand.hbm [shape: bf16[128,128], index: 2, kind: output, shape index: {0}]
  %s3 = inlined_call_operand.hbm [shape: f32[2,1,128], index: 3, kind: output, shape index: {1}]
  %s4 = inlined_call_operand.hbm [shape: f32[2,1,128], index: 4, kind: output, shape index: {2}]
  %5 = xla_tuple %s2, %s3, %s4
  %s6 = sld [smem:[#allocation0]]
  $region57: #{tpu_custom_call.1} parent=0
    _
  %s8 = ssub.s32 1, %s6
  %s9 = scalar_select 0, %s8, %s6
  $region1: #{tpu_custom_call.1} parent=0
    #allocation2 [shape = 'u8[32768]{0}', space=vmem, size = 0x8000, scoped, tag = 'output window, operand 0']
    #allocation3 [shape = 's32[2]{0}', space=sflag, size = 0x8, scoped, tag = 'scoped memory for tpu_custom_call.1']
    #allocation4 [shape = 'u8[1024]{0}', space=vmem, size = 0x400, scoped, tag = 'output window, operand 1']
    #allocation5 [shape = 's32[2]{0}', space=sflag, size = 0x8, scoped, tag = 'scoped memory for tpu_custom_call.1']
    #allocation6 [shape = 'u8[1024]{0}', space=vmem, size = 0x400, scoped, tag = 'output window, operand 2']
    %10 = vsyncpa [#allocation3], 0
    %s11 = scalar_lea.sflag [#allocation3], 1
    %12 = vsyncpa %s11, 0
    %13 = vsyncpa [#allocation5], 0
    %s14 = scalar_lea.sflag [#allocation5], 1
    %15 = vsyncpa %s14, 0
    loop: start=0, step=1, limit=4
    $region2: #{tpu_custom_call.1} parent=1 // loop_pre_header
      _
    $region3: #{tpu_custom_call.1} parent=1 // loop_header
      %s17 = sphi 0, %s21
      %p18 = scmp.ge.s32.totalorder %s17, 4
      %s27 = sphi 0, %s29
      %s30 = sphi 0, %s27
      %s31 = sphi 0, %s30
      %s47 = sphi 0, %s31
      %s51 = sphi 0, %s51
      %s53 = sphi 0, %s51
      %s54 = sphi 0, %s53
      %s68 = sphi 0, %s54
      %s74 = sphi 0, %s76
      %s77 = sphi 0, %s74
      %s78 = sphi 0, %s77
      %s94 = sphi 0, %s78
      %s100 = sphi 0, %s102
      %s103 = sphi 0, %s100
      %s104 = sphi 0, %s103
      %s120 = sphi 0, %s104
      %s126 = sphi 0, %s128
      %s129 = sphi 0, %s126
      %s130 = sphi 0, %s129
      %s146 = sphi 0, %s130
    $region4: #{tpu_custom_call.1} parent=1 // loop_header_branch
      %20 = sbr.rel (%p18) target = $region8
    $region5: #{tpu_custom_call.1} parent=1 // loop_body
      %s22 = ssub.s32 %s17, 1
      %s23 = ssub.s32 %s17, 2
      %s24 = sadd.s32 %s17, 1
      %s25 = ssub.s32 %s17, %s24
      %p26 = scmp.eq.s32.totalorder %s25, 0
      %s28 = sadd.s32 %s27, 1
      %s29 = scalar_select %p26, %s27, %s28
      %p32 = pneg %p26
      %p33 = scmp.eq.s32.totalorder %s17, 1
      %p34 = por %p32, %p33
      %p35 = scmp.ne.s32.totalorder %s27, %s30
      %p36 = scmp.eq.s32.totalorder %s17, 0
      %p37 = por %p35, %p36
      %p38 = scmp.ne.s32.totalorder %s27, %s30
      %p39 = scmp.eq.s32.totalorder %s22, 1
      %p40 = por %p38, %p39
      %p41 = scmp.ne.s32.totalorder %s30, %s31
      %p42 = scmp.eq.s32.totalorder %s22, 0
      %p43 = por %p41, %p42
      %p44 = scmp.ne.s32.totalorder %s30, %s31
      %p45 = scmp.eq.s32.totalorder %s23, 1
      %p46 = por %p44, %p45
      %p48 = scmp.ne.s32.totalorder %s31, %s47
      %p49 = scmp.eq.s32.totalorder %s23, 0
      %p50 = por %p48, %p49
      %s52 = sadd.s32 %s51, 1
      %p55 = scmp.eq.s32.totalorder %s17, 1
      %p56 = scmp.ne.s32.totalorder %s51, %s53
      %p57 = scmp.eq.s32.totalorder %s17, 0
      %p58 = por %p56, %p57
      %p59 = scmp.ne.s32.totalorder %s51, %s53
      %p60 = scmp.eq.s32.totalorder %s22, 1
      %p61 = por %p59, %p60
      %p62 = scmp.ne.s32.totalorder %s53, %s54
      %p63 = scmp.eq.s32.totalorder %s22, 0
      %p64 = por %p62, %p63
      %p65 = scmp.ne.s32.totalorder %s53, %s54
      %p66 = scmp.eq.s32.totalorder %s23, 1
      %p67 = por %p65, %p66
      %p69 = scmp.ne.s32.totalorder %s54, %s68
      %p70 = scmp.eq.s32.totalorder %s23, 0
      %p71 = por %p69, %p70
      %s72 = ssub.s32 %s17, %s24
      %p73 = scmp.eq.s32.totalorder %s72, 0
      %s75 = sadd.s32 %s74, 1
      %s76 = scalar_select %p73, %s74, %s75
      %p79 = pneg %p73
      %p80 = scmp.eq.s32.totalorder %s17, 1
      %p81 = por %p79, %p80
      %p82 = scmp.ne.s32.totalorder %s74, %s77
      %p83 = scmp.eq.s32.totalorder %s17, 0
      %p84 = por %p82, %p83
      %p85 = scmp.ne.s32.totalorder %s74, %s77
      %p86 = scmp.eq.s32.totalorder %s22, 1
      %p87 = por %p85, %p86
      %p88 = scmp.ne.s32.totalorder %s77, %s78
      %p89 = scmp.eq.s32.totalorder %s22, 0
      %p90 = por %p88, %p89
      %p91 = scmp.ne.s32.totalorder %s77, %s78
      %p92 = scmp.eq.s32.totalorder %s23, 1
      %p93 = por %p91, %p92
      %p95 = scmp.ne.s32.totalorder %s78, %s94
      %p96 = scmp.eq.s32.totalorder %s23, 0
      %p97 = por %p95, %p96
      %s98 = ssub.s32 %s17, %s24
      %p99 = scmp.eq.s32.totalorder %s98, 0
      %s101 = sadd.s32 %s100, 1
      %s102 = scalar_select %p99, %s100, %s101
      %p105 = pneg %p99
      %p106 = scmp.eq.s32.totalorder %s17, 1
      %p107 = por %p105, %p106
      %p108 = scmp.ne.s32.totalorder %s100, %s103
      %p109 = scmp.eq.s32.totalorder %s17, 0
      %p110 = por %p108, %p109
      %p111 = scmp.ne.s32.totalorder %s100, %s103
      %p112 = scmp.eq.s32.totalorder %s22, 1
      %p113 = por %p111, %p112
      %p114 = scmp.ne.s32.totalorder %s103, %s104
      %p115 = scmp.eq.s32.totalorder %s22, 0
      %p116 = por %p114, %p115
      %p117 = scmp.ne.s32.totalorder %s103, %s104
      %p118 = scmp.eq.s32.totalorder %s23, 1
      %p119 = por %p117, %p118
      %p121 = scmp.ne.s32.totalorder %s104, %s120
      %p122 = scmp.eq.s32.totalorder %s23, 0
      %p123 = por %p121, %p122
      %s124 = ssub.s32 %s17, %s24
      %p125 = scmp.eq.s32.totalorder %s124, 0
      %s127 = sadd.s32 %s126, 1
      %s128 = scalar_select %p125, %s126, %s127
      %p131 = pneg %p125
      %p132 = scmp.eq.s32.totalorder %s17, 1
      %p133 = por %p131, %p132
      %p134 = scmp.ne.s32.totalorder %s126, %s129
      %p135 = scmp.eq.s32.totalorder %s17, 0
      %p136 = por %p134, %p135
      %p137 = scmp.ne.s32.totalorder %s126, %s129
      %p138 = scmp.eq.s32.totalorder %s22, 1
      %p139 = por %p137, %p138
      %p140 = scmp.ne.s32.totalorder %s129, %s130
      %p141 = scmp.eq.s32.totalorder %s22, 0
      %p142 = por %p140, %p141
      %p143 = scmp.ne.s32.totalorder %s129, %s130
      %p144 = scmp.eq.s32.totalorder %s23, 1
      %p145 = por %p143, %p144
      %p147 = scmp.ne.s32.totalorder %s130, %s146
      %p148 = scmp.eq.s32.totalorder %s23, 0
      %p149 = por %p147, %p148
      %p150 = scmp.le.s32.totalorder 1, %s17
      %p151 = scmp.lt.s32.totalorder %s17, 3
      %p152 = pnand %p150, %p151
      %p153 = pneg %p152
      // Predicated region
      $region9: #{tpu_custom_call.1} parent=5 // pred_check
        _
      $region10: #{tpu_custom_call.1} parent=5 // pred_check_branch
        %155 = sbr.rel (%p152) target = $region12
      $region11: #{tpu_custom_call.1} parent=5 // pred_region
        %s156 = ssub.s32 %s17, 1
        // Predicated region
        $region13: #{tpu_custom_call.1} parent=11 // pred_check
          %p157 = pneg %p64
        $region14: #{tpu_custom_call.1} parent=11 // pred_check_branch
          %159 = sbr.rel (%p157) target = $region16
        $region15: #{tpu_custom_call.1} parent=11 // pred_region
          _
        $region16: #{tpu_custom_call.1} parent=11 // pred_fallthru
          _
      $region12: #{tpu_custom_call.1} parent=5 // pred_fallthru
        _
      %p160 = scmp.lt.s32.totalorder %s17, 2
      // Predicated region
      $region17: #{tpu_custom_call.1} parent=5 // pred_check
        %p161 = pneg %p160
      $region18: #{tpu_custom_call.1} parent=5 // pred_check_branch
        %163 = sbr.rel (%p161) target = $region20
      $region19: #{tpu_custom_call.1} parent=5 // pred_region
        // Predicated region
        $region21: #{tpu_custom_call.1} parent=19 // pred_check
          %p164 = pneg %p37
        $region22: #{tpu_custom_call.1} parent=19 // pred_check_branch
          %166 = sbr.rel (%p164) target = $region24
        $region23: #{tpu_custom_call.1} parent=19 // pred_region
          %s167 = smul.u32 8, %s17
          %p168 = scmp.lt.s32.totalorder %s167, 15
          %s169 = scalar_select %p168, %s167, 15
          %s170 = smul.addr %s169, 4
          %s171 = scalar_lea.vmem %s0, %s170
          %s172 = smul.u32 8, %s17
        $region24: #{tpu_custom_call.1} parent=19 // pred_fallthru
          _
      $region20: #{tpu_custom_call.1} parent=5 // pred_fallthru
        _
      %p173 = scmp.le.s32.totalorder 1, %s17
      %p174 = scmp.lt.s32.totalorder %s17, 3
      %p175 = pnand %p173, %p174
      %p176 = pneg %p175
      // Predicated region
      $region25: #{tpu_custom_call.1} parent=5 // pred_check
        _
      $region26: #{tpu_custom_call.1} parent=5 // pred_check_branch
        %178 = sbr.rel (%p175) target = $region28
      $region27: #{tpu_custom_call.1} parent=5 // pred_region
        %s179 = ssub.s32 %s17, 1
        %s180 = smul.u32 8, %s22
        %p181 = scmp.lt.s32.totalorder %s180, 15
        %s182 = scalar_select %p181, %s180, 15
        %s183 = smul.addr %s182, 4
        %s184 = scalar_lea.vmem %s0, %s183
        %p185 = pneg %p43
        %p186 = pneg %p40
        %p187 = pneg %p64
        %p188 = pneg %p61
        %p189 = pneg %p90
        %p190 = pneg %p87
        %s191 = sand.u32 %s77, 1
        %s192 = scalar_lea.sflag [#allocation3], %s191
        %s193 = sand.u32 %s77, 1
        %s194 = smul.addr %s193, 32
        %s195 = scalar_lea.vmem [#allocation2], %s194
        %p196 = pneg %p116
        %p197 = pneg %p113
        %s198 = sand.u32 %s22, 1
        %s199 = scalar_lea.sflag [#allocation5], %s198
        %s200 = sand.u32 %s103, 1
        %s201 = scalar_lea.vmem [#allocation4], %s200
        %p202 = pneg %p142
        %p203 = pneg %p139
        %s204 = sand.u32 %s22, 1
        %s205 = scalar_lea.sflag [#allocation5], %s204
        %s206 = sand.u32 %s129, 1
        %s207 = scalar_lea.vmem [#allocation6], %s206
        %s208 = smul.u32 8, %s22
        %p209 = scmp.lt.s32.totalorder %s208, 15
        %s210 = scalar_select %p209, %s208, 15
        %s211 = smul.addr %s210, 4
        %s212 = scalar_lea.vmem %s0, %s211
        %s213 = smul.u32 8, %s22
        %s214 = smul.u32 8, %s22
        %v216 = vld [vmem:[%s212] sm:$0xf]
        %v217 = vld [vmem:[%s212 + $0x4] sm:$0xf]
        %v218 = vld [vmem:[%s212 + $0x8] sm:$0xf]
        %v219 = vld [vmem:[%s212 + $0xc] sm:$0xf]
        %v220 = vld [vmem:[%s212 + $0x10] sm:$0xf]
        %v221 = vld [vmem:[%s212 + $0x14] sm:$0xf]
        %v222 = vld [vmem:[%s212 + $0x18] sm:$0xf]
        %v223 = vld [vmem:[%s212 + $0x1c] sm:$0xf]
        %v224 = vld [vmem:[%s1] sm:$0xf]
        %v225 = vld [vmem:[%s1 + $0x4] sm:$0xf]
        %v226 = vld [vmem:[%s1 + $0x8] sm:$0xf]
        %v227 = vld [vmem:[%s1 + $0xc] sm:$0xf]
        %v228 = vld [vmem:[%s1 + $0x10] sm:$0x3]
        %v237 = vunpack.c.l.b16 %v216
        %v238 = vunpack.c.l.b16 %v217
        %v239 = vunpack.c.l.b16 %v218
        %v240 = vunpack.c.l.b16 %v219
        %v241 = vunpack.c.l.b16 %v220
        %v242 = vunpack.c.l.b16 %v221
        %v243 = vunpack.c.l.b16 %v222
        %v244 = vunpack.c.l.b16 %v223
        %v245 = vpack.c.b16 %v238, %v237
        %v246 = vpack.c.b16 %v240, %v239
        %v247 = vpack.c.b16 %v242, %v241
        %v248 = vpack.c.b16 %v244, %v243
        %v254 = vunpack.c.l.b16 %v224
        %v255 = vunpack.c.l.b16 %v225
        %v256 = vunpack.c.l.b16 %v226
        %v257 = vunpack.c.l.b16 %v227
        %v258 = vunpack.c.l.b16 %v228
        %v259 = vpack.c.b16 %v255, %v254
        %v260 = vpack.c.b16 %v257, %v256
        %v261 = vpack.c.b16 %v258, %v258
        %vm264 = vcmask 293888
        %v266 = vsel %vm264, %v245, 0
        %v269 = vsel %vm264, %v246, 0
        %v272 = vsel %vm264, %v247, 0
        %v275 = vsel %vm264, %v248, 0
        %vm277 = vcmask 1041408
        %v279 = vsel %vm277, %v261, 0
        %281 = vmatprep.subr.bf16.mxu0 0
        %282 = vmatpush1.bf16.msra.mxu0 %v259
        %283 = vmatprep.subr.bf16.mxu0 0
        %284 = vmatpush1.bf16.msra.mxu0 %v260
        %285 = vmatprep.subr.bf16.mxu0 0
        %286 = vmatpush1.bf16.msra.mxu0 %v279
        %287 = vmatprep.subr.bf16.mxu0 0
        %288 = vmatpush1.bf16.msra.mxu0 0
        %289 = vmatprep.subr.bf16.mxu0 0
        %290 = vmatpush1.bf16.msra.mxu0 0
        %291 = vmatprep.subr.bf16.mxu0 0
        %292 = vmatpush1.bf16.msra.mxu0 0
        %293 = vmatprep.subr.bf16.mxu0 0
        %294 = vmatpush1.bf16.msra.mxu0 0
        %295 = vmatprep.subr.bf16.mxu0 0
        %296 = vmatpush1.bf16.msra.mxu0 0
        %297 = vmatprep.subr.bf16.mxu0 0
        %298 = vmatpush1.bf16.msra.mxu0 0
        %299 = vmatprep.subr.bf16.mxu0 0
        %300 = vmatpush1.bf16.msra.mxu0 0
        %301 = vmatprep.subr.bf16.mxu0 0
        %302 = vmatpush1.bf16.msra.mxu0 0
        %303 = vmatprep.subr.bf16.mxu0 0
        %304 = vmatpush1.bf16.msra.mxu0 0
        %305 = vmatprep.subr.bf16.mxu0 0
        %306 = vmatpush1.bf16.msra.mxu0 0
        %307 = vmatprep.subr.bf16.mxu0 0
        %308 = vmatpush1.bf16.msra.mxu0 0
        %309 = vmatprep.subr.bf16.mxu0 0
        %310 = vmatpush1.bf16.msra.mxu0 0
        %311 = vmatprep.subr.bf16.mxu0 0
        %312 = vmatpush1.bf16.msra.mxu0 0
        %313 = vmatprep.mubr.bf16.mxu0 0
        %314 = vmatmul.mubr.bf16.gmra.mrb[0].mxu0 %v266
        %v315 = vpop.f32.mrb[0].mxu0
        %v316 = vadd.f32 0.0, %v315
        %v317 = vpop.f32.mrb[0].mxu0
        %v318 = vpop.f32.mrb[0].mxu0
        %v319 = vadd.f32 0.0, %v318
        %v320 = vpop.f32.mrb[0].mxu0
        %321 = vmatprep.mubr.bf16.mxu0 0
        %322 = vmatmul.mubr.bf16.gmra.mrb[0].mxu0 %v269
        %v323 = vpop.f32.mrb[0].mxu0
        %v324 = vadd.f32 0.0, %v323
        %v325 = vpop.f32.mrb[0].mxu0
        %v326 = vpop.f32.mrb[0].mxu0
        %v327 = vadd.f32 0.0, %v326
        %v328 = vpop.f32.mrb[0].mxu0
        %329 = vmatprep.mubr.bf16.mxu0 0
        %330 = vmatmul.mubr.bf16.gmra.mrb[0].mxu0 %v272
        %v331 = vpop.f32.mrb[0].mxu0
        %v332 = vadd.f32 0.0, %v331
        %v333 = vpop.f32.mrb[0].mxu0
        %v334 = vpop.f32.mrb[0].mxu0
        %v335 = vadd.f32 0.0, %v334
        %v336 = vpop.f32.mrb[0].mxu0
        %337 = vmatprep.mubr.bf16.mxu0 0
        %338 = vmatmul.mubr.bf16.gmra.mrb[0].mxu0 %v275
        %v339 = vpop.f32.mrb[0].mxu0
        %v340 = vadd.f32 0.0, %v339
        %v341 = vpop.f32.mrb[0].mxu0
        %v342 = vpop.f32.mrb[0].mxu0
        %v343 = vadd.f32 0.0, %v342
        %v344 = vpop.f32.mrb[0].mxu0
        %345 = vdwg.mxu0
        %v346 = vpack.c.bf16 %v319, %v316
        %v347 = vpack.c.bf16 %v327, %v324
        %v348 = vpack.c.bf16 %v335, %v332
        %v349 = vpack.c.bf16 %v343, %v340
        %v354 = vunpack.c.l.b16 %v346
        %v355 = vunpack.c.h.b16 %v346
        %v356 = vunpack.c.l.b16 %v347
        %v357 = vunpack.c.h.b16 %v347
        %v358 = vunpack.c.l.b16 %v348
        %v359 = vunpack.c.h.b16 %v348
        %v360 = vunpack.c.l.b16 %v349
        %v361 = vunpack.c.h.b16 %v349
        %v362 = vpack.c.b16 %v354, %v354
        %v363 = vpack.c.b16 %v355, %v355
        %v364 = vpack.c.b16 %v356, %v356
        %v365 = vpack.c.b16 %v357, %v357
        %v366 = vpack.c.b16 %v358, %v358
        %v367 = vpack.c.b16 %v359, %v359
        %v368 = vpack.c.b16 %v360, %v360
        %v369 = vpack.c.b16 %v361, %v361
        %378 = vst [vmem:[%s195] sm:$0xf] %v362
        %379 = vst [vmem:[%s195 + $0x4] sm:$0xf] %v363
        %380 = vst [vmem:[%s195 + $0x8] sm:$0xf] %v364
        %381 = vst [vmem:[%s195 + $0xc] sm:$0xf] %v365
        %382 = vst [vmem:[%s195 + $0x10] sm:$0xf] %v366
        %383 = vst [vmem:[%s195 + $0x14] sm:$0xf] %v367
        %384 = vst [vmem:[%s195 + $0x18] sm:$0xf] %v368
        %385 = vst [vmem:[%s195 + $0x1c] sm:$0xf] %v369
        %v386 = vadd.f32 %v316, %v319
        %v387 = vadd.f32 %v386, %v324
        %v388 = vadd.f32 %v387, %v327
        %v389 = vadd.f32 %v388, %v332
        %v390 = vadd.f32 %v389, %v335
        %v391 = vadd.f32 %v390, %v340
        %v392 = vadd.f32 %v391, %v343
        %v393 = vrot.slane %v392, 4
        %v394 = vadd.f32 %v392, %v393
        %v395 = vrot.slane %v394, 2
        %v396 = vadd.f32 %v394, %v395
        %v397 = vrot.slane %v396, 1
        %v398 = vadd.f32 %v396, %v397
        %399 = vst [vmem:[%s201] sm:$0x1] %v398
        %v400 = vmul.f32 %v316, %v316
        %v401 = vmul.f32 %v319, %v319
        %v402 = vmul.f32 %v324, %v324
        %v403 = vmul.f32 %v327, %v327
        %v404 = vmul.f32 %v332, %v332
        %v405 = vmul.f32 %v335, %v335
        %v406 = vmul.f32 %v340, %v340
        %v407 = vmul.f32 %v343, %v343
        %v408 = vadd.f32 %v400, %v401
        %v409 = vadd.f32 %v408, %v402
        %v410 = vadd.f32 %v409, %v403
        %v411 = vadd.f32 %v410, %v404
        %v412 = vadd.f32 %v411, %v405
        %v413 = vadd.f32 %v412, %v406
        %v414 = vadd.f32 %v413, %v407
        %v415 = vrot.slane %v414, 4
        %v416 = vadd.f32 %v414, %v415
        %v417 = vrot.slane %v416, 2
        %v418 = vadd.f32 %v416, %v417
        %v419 = vrot.slane %v418, 1
        %v420 = vadd.f32 %v418, %v419
        %421 = vst [vmem:[%s207] sm:$0x1] %v420
        %s422 = sand.u32 %s77, 1
        %s423 = scalar_lea.sflag [#allocation3], %s422
        %s424 = sand.u32 %s77, 1
        %s425 = smul.addr %s424, 32
        %s426 = scalar_lea.vmem [#allocation2], %s425
        %s427 = sand.u32 %s22, 1
        %s428 = scalar_lea.sflag [#allocation5], %s427
        %s429 = sand.u32 %s103, 1
        %s430 = scalar_lea.vmem [#allocation4], %s429
        %s431 = sand.u32 %s22, 1
        %s432 = scalar_lea.sflag [#allocation5], %s431
        %s433 = sand.u32 %s129, 1
        %s434 = scalar_lea.vmem [#allocation6], %s433
        // Predicated region
        $region29: #{tpu_custom_call.1} parent=27 // pred_check
          %p435 = pneg %p87
        $region30: #{tpu_custom_call.1} parent=27 // pred_check_branch
          %437 = sbr.rel (%p435) target = $region32
        $region31: #{tpu_custom_call.1} parent=27 // pred_region
          %s438 = smul.u32 8, %s22
          %s440 = ssub.s32 512, 512
          %441 = vsyncadd %s423, %s440
          %s442 = smul.addr %s438, 64
          %s443 = scalar_lea.hbm %s2, %s442
          %s444 = sshll.u32 %s426, 4
          %s445 = int_to_ptr.vmem [resolvable:$true] %s444
          %450 = dma.vmem_to_hbm [thread:$0]  %s445, 512, %s443, %s423, 64, 64, 4
        $region32: #{tpu_custom_call.1} parent=27 // pred_fallthru
          _
        // Predicated region
        $region33: #{tpu_custom_call.1} parent=27 // pred_check
          %p451 = pneg %p113
        $region34: #{tpu_custom_call.1} parent=27 // pred_check_branch
          %453 = sbr.rel (%p451) target = $region36
        $region35: #{tpu_custom_call.1} parent=27 // pred_region
          %s455 = ssub.s32 16, 16
          %456 = vsyncadd %s428, %s455
          %s457 = smul.addr %s22, 16
          %s458 = scalar_lea.hbm %s3, %s457
          %s460 = sshll.u32 %s430, 4
          %s461 = int_to_ptr.vmem [resolvable:$true] %s460
          %463 = dma.vmem_to_hbm [thread:$0]  %s461, 16, %s458, %s428
        $region36: #{tpu_custom_call.1} parent=27 // pred_fallthru
          _
        // Predicated region
        $region37: #{tpu_custom_call.1} parent=27 // pred_check
          %p464 = pneg %p139
        $region38: #{tpu_custom_call.1} parent=27 // pred_check_branch
          %466 = sbr.rel (%p464) target = $region40
        $region39: #{tpu_custom_call.1} parent=27 // pred_region
          %s468 = ssub.s32 16, 16
          %469 = vsyncadd %s432, %s468
          %s470 = smul.addr %s22, 16
          %s471 = scalar_lea.hbm %s4, %s470
          %s473 = sshll.u32 %s434, 4
          %s474 = int_to_ptr.vmem [resolvable:$true] %s473
          %476 = dma.vmem_to_hbm [thread:$0]  %s474, 16, %s471, %s432
        $region40: #{tpu_custom_call.1} parent=27 // pred_fallthru
          _
      $region28: #{tpu_custom_call.1} parent=5 // pred_fallthru
        _
      %p477 = scmp.le.s32.totalorder 2, %s17
      // Predicated region
      $region41: #{tpu_custom_call.1} parent=5 // pred_check
        %p478 = pneg %p477
      $region42: #{tpu_custom_call.1} parent=5 // pred_check_branch
        %480 = sbr.rel (%p478) target = $region44
      $region43: #{tpu_custom_call.1} parent=5 // pred_region
        %s481 = ssub.s32 %s17, 2
        // Predicated region
        $region45: #{tpu_custom_call.1} parent=43 // pred_check
          %p482 = pneg %p93
        $region46: #{tpu_custom_call.1} parent=43 // pred_check_branch
          %484 = sbr.rel (%p482) target = $region48
        $region47: #{tpu_custom_call.1} parent=43 // pred_region
          %s485 = sand.u32 %s78, 1
          %s486 = scalar_lea.sflag [#allocation3], %s485
          %s487 = sand.u32 %s78, 1
          %s488 = smul.addr %s487, 32
          %s489 = scalar_lea.vmem [#allocation2], %s488
          %490 = dma.done %s486, 512
        $region48: #{tpu_custom_call.1} parent=43 // pred_fallthru
          _
        // Predicated region
        $region49: #{tpu_custom_call.1} parent=43 // pred_check
          %p491 = pneg %p119
        $region50: #{tpu_custom_call.1} parent=43 // pred_check_branch
          %493 = sbr.rel (%p491) target = $region52
        $region51: #{tpu_custom_call.1} parent=43 // pred_region
          %s494 = sand.u32 %s23, 1
          %s495 = scalar_lea.sflag [#allocation5], %s494
          %s496 = sand.u32 %s104, 1
          %s497 = scalar_lea.vmem [#allocation4], %s496
          %498 = dma.done %s495, 16
        $region52: #{tpu_custom_call.1} parent=43 // pred_fallthru
          _
        // Predicated region
        $region53: #{tpu_custom_call.1} parent=43 // pred_check
          %p499 = pneg %p145
        $region54: #{tpu_custom_call.1} parent=43 // pred_check_branch
          %501 = sbr.rel (%p499) target = $region56
        $region55: #{tpu_custom_call.1} parent=43 // pred_region
          %s502 = sand.u32 %s23, 1
          %s503 = scalar_lea.sflag [#allocation5], %s502
          %s504 = sand.u32 %s130, 1
          %s505 = scalar_lea.vmem [#allocation6], %s504
          %506 = dma.done %s503, 16
        $region56: #{tpu_custom_call.1} parent=43 // pred_fallthru
          _
      $region44: #{tpu_custom_call.1} parent=5 // pred_fallthru
        _
    $region6: #{tpu_custom_call.1} parent=1 // loop_footer
      %s21 = sadd.s32 1, %s17
    $region7: #{tpu_custom_call.1} parent=1 // loop_footer_branch
      %16 = sbr.rel target = $region3
    $region8: #{tpu_custom_call.1} parent=1 // loop_exit
      _
    %507 = vsyncpa [#allocation3], 1
    %s508 = scalar_lea.sflag [#allocation3], 1
    %509 = vsyncpa %s508, 1
    %510 = vsyncpa [#allocation5], 1
    %s511 = scalar_lea.sflag [#allocation5], 1
    %512 = vsyncpa %s511, 1

</llo_original>
